<compile_context>
chip_gen: v5e
topology: v5e:2x2
jax: 0.10.0
libtpu: 0.0.40
codegen_flags: <defaults>
</compile_context>

<pallas_src>
import jax
import jax.numpy as jnp
from jax import lax
from jax.experimental import pallas as pl
from jax.experimental.pallas import tpu as pltpu


def _linear_add_kernel(x_ref, wT_ref, other_ref, o_ref):
    # x:(R,K) VMEM   wT:(K,N) VMEM   other:(1,N) VMEM (bias pre-folded)   o:(R,N) VMEM
    x = x_ref[...]
    wT = wT_ref[...]
    # x @ W^T with the weight already laid out as (K, N): contract K on axis 1
    # of x against axis 0 of wT — the canonical MXU-friendly contraction.
    acc = lax.dot_general(
        x, wT,
        dimension_numbers=(((1,), (0,)), ((), ())),
        preferred_element_type=jnp.float32,
    )
    acc = acc + other_ref[...]     # (1,N) broadcasts over all rows (bias + other)
    o_ref[...] = acc.astype(o_ref.dtype)


def linear_add(x1, weight, bias, other):
    """x1:(B,M,K) f32, weight:(N,K) f32, bias:(1,) f32, other:(1,1,N) f32
    returns (B,M,N) f32 == (x1 @ weight.T + bias) + other"""
    B, M, K = x1.shape
    N = weight.shape[0]
    assert weight.shape == (N, K)
    assert bias.shape == (1,)
    assert other.shape == (1, 1, N)

    R = B * M                                   # stack all batch rows into one call
    x2d = x1.reshape(R, K).astype(jnp.float32)
    wT = weight.astype(jnp.float32).T           # (K, N) one-time transpose, outside the kernel
    # Fold the scalar bias into the (1,N) residual: one fewer kernel operand.
    other2d = (other.reshape(1, N) + bias).astype(jnp.float32)

    cost = pl.CostEstimate(
        flops=2 * R * N * K,
        bytes_accessed=4 * (R * K + K * N + N + R * N),
        transcendentals=0,
    )

    out2d = pl.pallas_call(
        _linear_add_kernel,
        out_shape=jax.ShapeDtypeStruct((R, N), jnp.float32),
        in_specs=[
            pl.BlockSpec(memory_space=pltpu.VMEM),   # x     (R,K)
            pl.BlockSpec(memory_space=pltpu.VMEM),   # wT    (K,N)
            pl.BlockSpec(memory_space=pltpu.VMEM),   # other (1,N) with bias folded in
        ],
        out_specs=pl.BlockSpec(memory_space=pltpu.VMEM),
        cost_estimate=cost,
    )(x2d, wT, other2d)

    return out2d.reshape(B, M, N)


if __name__ == "__main__":
    key = jax.random.PRNGKey(0)
    k_x, k_w, k_b, k_o, k_xb = jax.random.split(key, 5)

    # Shapes implied by the module: weight (5,5), bias (1,), x1 (1,5,5), other (1,1,5)
    x1 = jax.random.normal(k_x, (1, 5, 5), dtype=jnp.float32)
    weight = jax.random.normal(k_w, (5, 5), dtype=jnp.float32)
    bias = jax.random.normal(k_b, (1,), dtype=jnp.float32)
    other = jax.random.normal(k_o, (1, 1, 5), dtype=jnp.float32)

    out = linear_add(x1, weight, bias, other)
    out = jax.block_until_ready(out)

    ref = jnp.einsum("bmk,nk->bmn", x1, weight) + bias + other
    assert out.shape == (1, 5, 5)
    assert jnp.allclose(out, ref, atol=1e-5, rtol=1e-5)

    # Batched invocation check (lifted `assert B == 1`): many samples, one call.
    xb = jax.random.normal(k_xb, (4, 5, 5), dtype=jnp.float32)
    out_b = jax.block_until_ready(linear_add(xb, weight, bias, other))
    ref_b = jnp.einsum("bmk,nk->bmn", xb, weight) + bias + other
    assert out_b.shape == (4, 5, 5)
    assert jnp.allclose(out_b, ref_b, atol=1e-5, rtol=1e-5)

    print("KERNEL_OK")
</pallas_src>

<mosaic_0001>
module attributes {stable_mosaic.version = 11 : i64} {
  func.func @_linear_add_kernel(%arg0: memref<5x5xf32, #tpu.memory_space<vmem>>, %arg1: memref<5x5xf32, #tpu.memory_space<vmem>>, %arg2: memref<1x5xf32, #tpu.memory_space<vmem>>, %arg3: memref<5x5xf32, #tpu.memory_space<vmem>>) attributes {dimension_semantics = [], scalar_prefetch = 0 : i64, scratch_operands = 0 : i64, tpu.core_type = #tpu.core_type<tc>} {
    %c0 = arith.constant 0 : index
    %c0_0 = arith.constant 0 : index
    %0 = vector.load %arg0[%c0, %c0_0] : memref<5x5xf32, #tpu.memory_space<vmem>>, vector<5x5xf32>
    %c0_1 = arith.constant 0 : index
    %c0_2 = arith.constant 0 : index
    %1 = vector.load %arg1[%c0_1, %c0_2] : memref<5x5xf32, #tpu.memory_space<vmem>>, vector<5x5xf32>
    %cst = arith.constant dense<0.000000e+00> : vector<5x5xf32>
    %2 = tpu.matmul %0, %1, %cst {dimension_numbers = #tpu.dot_dimension_numbers<[1], [0], [0], [1], [0, 0, 1, 1], [], []>} : vector<5x5xf32>, vector<5x5xf32>, vector<5x5xf32> -> vector<5x5xf32>
    %c0_3 = arith.constant 0 : index
    %c0_4 = arith.constant 0 : index
    %3 = vector.load %arg2[%c0_3, %c0_4] : memref<1x5xf32, #tpu.memory_space<vmem>>, vector<1x5xf32>
    %4 = vector.broadcast %3 : vector<1x5xf32> to vector<5x5xf32>
    %5 = arith.addf %2, %4 : vector<5x5xf32>
    %c0_5 = arith.constant 0 : index
    %c0_6 = arith.constant 0 : index
    %6 = vector.load %arg3[%c0_5, %c0_6] : memref<5x5xf32, #tpu.memory_space<vmem>>, vector<5x5xf32>
    tpu.vector_store %arg3[%c0_5, %c0_6], %5 {strides = array<i32>} : memref<5x5xf32, #tpu.memory_space<vmem>>, vector<5x5xf32>,
    return
  }
}

</mosaic_0001>

<llo_original>
// kernel: tpu_custom_call.1
$region0: #{tpu_custom_call.1}
  #allocation0 [shape = 'u32[]', space=smem, size = 0x4, offset = 0x4, fixed_abs, tag = 'smem constant byte address 0x4 - core index']
  #allocation1 [shape = 'u32[72,128]{1,0:T(1,128)}', space=vmem, size = 0x9000, scoped, tag = 'internal scratch']
  %s0 = inlined_call_operand.hbm [shape: f32[5,5], index: 0, kind: input, shape index: {}]
  %s1 = inlined_call_operand.hbm [shape: f32[5,5], index: 1, kind: input, shape index: {}]
  %s2 = inlined_call_operand.vmem [shape: f32[1,5], index: 2, kind: input, shape index: {}]
  %s3 = inlined_call_operand.hbm [shape: f32[5,5], index: 3, kind: output, shape index: {}]
  %s4 = sld [smem:[#allocation0]]
  $region30: #{tpu_custom_call.1} parent=0
    _
  %s6 = ssub.s32 1, %s4
  %s7 = scalar_select 0, %s6, %s4
  $region1: #{tpu_custom_call.1} parent=0
    #allocation2 [shape = 'u8[4096]{0}', space=vmem, size = 0x1000, scoped, tag = 'input window, operand 0, single buffered']
    #allocation3 [shape = 's32[1]{0}', space=sflag, size = 0x4, scoped, tag = 'scoped memory for tpu_custom_call.1']
    #allocation4 [shape = 's32[1]{0}', space=sflag, size = 0x4, scoped, tag = 'scoped memory for tpu_custom_call.1']
    #allocation5 [shape = 'u8[4096]{0}', space=vmem, size = 0x1000, scoped, tag = 'input window, operand 1, single buffered']
    #allocation6 [shape = 's32[1]{0}', space=sflag, size = 0x4, scoped, tag = 'scoped memory for tpu_custom_call.1']
    #allocation7 [shape = 'u8[4096]{0}', space=vmem, size = 0x1000, scoped, tag = 'output window, operand 0, single buffered']
    %8 = vsyncpa [#allocation3], 0
    %9 = vsyncpa [#allocation6], 0
    %10 = vsyncpa [#allocation4], 0
    // Predicated region
    $region2: #{tpu_custom_call.1} parent=1 // pred_check
      _
    $region3: #{tpu_custom_call.1} parent=1 // pred_check_branch
      %12 = sbr.rel (0) target = $region5
    $region4: #{tpu_custom_call.1} parent=1 // pred_region
      %14 = vsyncadd [#allocation3], 0
      %s16 = sshll.u32 %s0, 4
      %s17 = int_to_ptr.hbm [resolvable:$true] %s16
      %s18 = sshll.u32 [#allocation2], 4
      %s19 = int_to_ptr.vmem [resolvable:$true] %s18
      %21 = dma.hbm_to_vmem [thread:$0]  %s17, 128, %s19, [#allocation3]
    $region5: #{tpu_custom_call.1} parent=1 // pred_fallthru
      _
    // Predicated region
    $region6: #{tpu_custom_call.1} parent=1 // pred_check
      _
    $region7: #{tpu_custom_call.1} parent=1 // pred_check_branch
      %23 = sbr.rel (0) target = $region9
    $region8: #{tpu_custom_call.1} parent=1 // pred_region
      %25 = vsyncadd [#allocation6], 0
      %s27 = sshll.u32 %s1, 4
      %s28 = int_to_ptr.hbm [resolvable:$true] %s27
      %s29 = sshll.u32 [#allocation5], 4
      %s30 = int_to_ptr.vmem [resolvable:$true] %s29
      %32 = dma.hbm_to_vmem [thread:$0]  %s28, 128, %s30, [#allocation6]
    $region9: #{tpu_custom_call.1} parent=1 // pred_fallthru
      _
    // Predicated region
    $region10: #{tpu_custom_call.1} parent=1 // pred_check
      _
    $region11: #{tpu_custom_call.1} parent=1 // pred_check_branch
      %34 = sbr.rel (0) target = $region13
    $region12: #{tpu_custom_call.1} parent=1 // pred_region
      _
    $region13: #{tpu_custom_call.1} parent=1 // pred_fallthru
      _
    // Predicated region
    $region14: #{tpu_custom_call.1} parent=1 // pred_check
      _
    $region15: #{tpu_custom_call.1} parent=1 // pred_check_branch
      %36 = sbr.rel (0) target = $region17
    $region16: #{tpu_custom_call.1} parent=1 // pred_region
      %38 = dma.done [#allocation3], 128
    $region17: #{tpu_custom_call.1} parent=1 // pred_fallthru
      _
    // Predicated region
    $region18: #{tpu_custom_call.1} parent=1 // pred_check
      _
    $region19: #{tpu_custom_call.1} parent=1 // pred_check_branch
      %40 = sbr.rel (0) target = $region21
    $region20: #{tpu_custom_call.1} parent=1 // pred_region
      %42 = dma.done [#allocation6], 128
    $region21: #{tpu_custom_call.1} parent=1 // pred_fallthru
      _
    %v43 = vld [vmem:[#allocation2] sm:$0x1f]
    %v44 = vld [vmem:[#allocation5] sm:$0x1f]
    %v45 = vld [vmem:[%s2] sm:$0x1]
    %v47 = vperm.slane %v45, 0
    %vm49 = vcmask 39936
    %v51 = vsel %vm49, %v43, 0
    %vm53 = vcmask 1044480
    %v55 = vsel %vm53, %v44, 0
    %57 = vmatpush.msra.mxu0 0.0
    %58 = vmatpush.msra.mxu0 0.0
    %59 = vmatpush.msra.mxu0 0.0
    %60 = vmatpush.msra.mxu0 0.0
    %61 = vmatpush.msra.mxu0 0.0
    %62 = vmatpush.msra.mxu0 0.0
    %63 = vmatpush.msra.mxu0 0.0
    %64 = vmatpush.msra.mxu0 0.0
    %65 = vmatpush.msra.mxu0 0.0
    %66 = vmatpush.msra.mxu0 0.0
    %67 = vmatpush.msra.mxu0 0.0
    %68 = vmatpush.msra.mxu0 0.0
    %69 = vmatpush.msra.mxu0 0.0
    %70 = vmatpush.msra.mxu0 0.0
    %71 = vmatpush.msra.mxu0 0.0
    %72 = vmatpush.msra.mxu0 %v55
    %73 = vmatmul.f32.gmra.mxu0 %v51
    %v74 = vpop.f32.mrf.mxu0
    %v75 = vadd.f32 %v47, %v74
    %76 = vdwg.mxu0
    %vm77 = vcmask 36864
    %78 = vst.msk [vmem:[#allocation7] sm:$0x1f] %vm77, %v75
    // Predicated region
    $region22: #{tpu_custom_call.1} parent=1 // pred_check
      _
    $region23: #{tpu_custom_call.1} parent=1 // pred_check_branch
      %80 = sbr.rel (0) target = $region25
    $region24: #{tpu_custom_call.1} parent=1 // pred_region
      %82 = vsyncadd [#allocation4], 0
      %s84 = sshll.u32 [#allocation7], 4
      %s85 = int_to_ptr.vmem [resolvable:$true] %s84
      %s86 = sshll.u32 %s3, 4
      %s87 = int_to_ptr.hbm [resolvable:$true] %s86
      %89 = dma.vmem_to_hbm [thread:$0]  %s85, 128, %s87, [#allocation4]
    $region25: #{tpu_custom_call.1} parent=1 // pred_fallthru
      _
    // Predicated region
    $region26: #{tpu_custom_call.1} parent=1 // pred_check
      _
    $region27: #{tpu_custom_call.1} parent=1 // pred_check_branch
      %91 = sbr.rel (0) target = $region29
    $region28: #{tpu_custom_call.1} parent=1 // pred_region
      %93 = dma.done [#allocation4], 128
    $region29: #{tpu_custom_call.1} parent=1 // pred_fallthru
      _
    %94 = vsyncpa [#allocation3], 1
    %95 = vsyncpa [#allocation6], 1
    %96 = vsyncpa [#allocation4], 1

</llo_original>
